<compile_context>
chip_gen: v7x
topology: tpu7x:2x2x1
jax: 0.10.0
libtpu: 0.0.40
codegen_flags: <defaults>
</compile_context>

<pallas_src>
from functools import partial

import jax
import jax.numpy as jnp
from jax.experimental import pallas as pl
from jax.experimental.pallas import tpu as pltpu


_LANE = 128
_MAX_LANE = 32768        # widest lane-dense slab we will form
_MIN_BLOCKS = 8          # aim for >= this many grid steps (TC sharding on v7x)
_HARD_SUBLANE = 8        # Mosaic hard requirement on 2nd-to-last block dim


def _seq_passthrough_kernel(x_ref, o_ref):
    # Fused chain of _ModuleBase.forward applications: each stage maps x -> x,
    # so the composed sequential reduces to a single elementwise copy of the
    # (lane-dense) block.  Future non-identity children would fuse compute here.
    o_ref[...] = x_ref[...]


def _sublane_for_itemsize(itemsize):
    """Packed-tile height: 8 rows for f32, 16 for bf16, 32 for int8/fp8."""
    return max(_HARD_SUBLANE, (_HARD_SUBLANE * 4) // max(1, itemsize))


def _vmem_budget():
    """(per-block byte cap, vmem_limit_bytes) sized to the running chip."""
    try:
        vmem = int(pltpu.get_tpu_info().vmem_capacity_bytes)
    except Exception:
        vmem = 64 * 1024 * 1024                      # conservative (v7x-sized)
    if vmem <= 64 * 1024 * 1024:                     # v7x: 64 MiB per TC
        return 4 * 1024 * 1024, 48 * 1024 * 1024
    return 8 * 1024 * 1024, 64 * 1024 * 1024         # v5e / v6e: 128 MiB


def _pick_block_rows(rows, lane, itemsize, block_bytes_cap, sublane):
    """Block row count: multiple of 8 (hard), prefer packed-sublane multiple,
    bounded by the per-block byte cap, and small enough to give >= _MIN_BLOCKS
    grid steps when the tensor is large.  Ragged last block is handled by
    pl.cdiv + Pallas masking, so no exact-divisor search is needed."""
    if rows <= _HARD_SUBLANE:
        return rows                                   # full-dim block: legal
    cap_rows = max(_HARD_SUBLANE,
                   (block_bytes_cap // (lane * itemsize))
                   // _HARD_SUBLANE * _HARD_SUBLANE)
    target = pl.cdiv(rows, _MIN_BLOCKS)
    target = max(_HARD_SUBLANE,
                 ((target + sublane - 1) // sublane) * sublane)
    block_rows = min(cap_rows, target, (rows // _HARD_SUBLANE) * _HARD_SUBLANE)
    return max(_HARD_SUBLANE, block_rows)


def _lane_dense_tiling(total_elems, itemsize, block_bytes_cap):
    """Pick (rows, lane, block_rows) for a flat lane-dense slab, or None."""
    if total_elems % _LANE != 0:
        return None
    sublane = _sublane_for_itemsize(itemsize)

    dense_wide = None    # rows % sublane == 0 and rows >= 2*sublane (splittable)
    dense = None         # rows % sublane == 0
    any_lane = None
    lane = _LANE
    while lane <= min(_MAX_LANE, total_elems) and total_elems % lane == 0:
        rows = total_elems // lane
        any_lane = lane
        if rows % sublane == 0:
            dense = lane
            if rows >= 2 * sublane:
                dense_wide = lane
        lane *= 2

    lane = dense_wide or dense or any_lane
    if lane is None:
        return None
    rows = total_elems // lane
    block_rows = _pick_block_rows(rows, lane, itemsize, block_bytes_cap, sublane)
    return rows, lane, block_rows


@partial(jax.jit, static_argnums=(1, 2, 3, 4), donate_argnums=(0,))
def _pallas_copy(x, rows, lane, block_rows, vmem_limit_bytes):
    """Lane-dense tiled copy of x (flattened to rows x lane) via Pallas."""
    x2d = x.reshape(rows, lane)
    bytes_accessed = 2 * rows * lane * x2d.dtype.itemsize
    out2d = pl.pallas_call(
        _seq_passthrough_kernel,
        out_shape=jax.ShapeDtypeStruct((rows, lane), x2d.dtype),
        grid_spec=pl.GridSpec(
            grid=(pl.cdiv(rows, block_rows),),        # ragged last block OK
            in_specs=[pl.BlockSpec((block_rows, lane), lambda i: (i, 0))],
            out_specs=pl.BlockSpec((block_rows, lane), lambda i: (i, 0)),
        ),
        # Output aliases the (donated) input: no second HBM buffer.
        input_output_aliases={0: 0},
        compiler_params=pltpu.CompilerParams(
            dimension_semantics=("parallel",),        # shards across v7x's 2 TCs
            vmem_limit_bytes=vmem_limit_bytes,
        ),
        cost_estimate=pl.CostEstimate(
            flops=0, transcendentals=0, bytes_accessed=bytes_accessed),
    )(x2d)
    return out2d.reshape(x.shape)


def fused_chain_pallas(x):
    """Fusion scaffold: fused pass of x through the child chain.

    With only _ModuleBase children the chain is the identity, so this is a
    pure memcpy; forward() does NOT call it on the identity path.  It is the
    dispatch point where non-identity children's per-stage compute would fuse.
    NOTE: the argument buffer is donated (do not reuse it after this call).
    """
    total = x.size
    itemsize = jnp.dtype(x.dtype).itemsize
    block_cap, vmem_limit = _vmem_budget()
    tiling = _lane_dense_tiling(total, itemsize, block_cap)
    if tiling is None:
        # Not lane-dense tileable: zero-cost identity path, no kernel launch.
        return jnp.asarray(x)
    rows, lane, block_rows = tiling
    return _pallas_copy(x, rows, lane, block_rows, vmem_limit)


class SequentialModulePallas:
    """JAX/Pallas port of _SequentialModule with _ModuleBase children."""

    def __init__(self, in_shape, num_modules):
        self.in_shape = tuple(in_shape)
        self.out_shape = tuple(in_shape)     # identity children preserve shape
        self.num_modules = num_modules
        # All supplied children are _ModuleBase identities; if a non-identity
        # child were plugged in, this flag would route x through the fused
        # Pallas chain instead of the zero-cost fast path.
        self._has_nonidentity_children = False

    def get_initial_state(self, batch_size):
        # Each _ModuleBase child returns () as its initial state.
        return [() for _ in range(self.num_modules)]

    def get_initial_output(self, batch_size, dtype=jnp.float32):
        # Last child's get_initial_output: zeros((batch,) + out_shape).
        return jnp.zeros((batch_size,) + self.out_shape, dtype=dtype)

    def forward(self, inp, hidden_state):
        assert inp.shape[1:] == self.in_shape

        if self._has_nonidentity_children:
            x = fused_chain_pallas(inp)
        else:
            # All children are identities: the composed chain is the identity
            # on x, so skip the copy kernel entirely (no launch, no HBM traffic).
            x = inp

        # Mirror the PyTorch loop's hidden-state collection exactly: each
        # _ModuleBase child returns its hidden state unchanged.
        new_state = [hidden_state[i] for i in range(self.num_modules)]
        return x, new_state

    # TODO(synk): if non-identity children (Linear/Conv/RNN cells) are plugged
    # into _SequentialModule, fuse their per-stage compute into
    # _seq_passthrough_kernel (or chained pallas_calls) and set
    # _has_nonidentity_children; with only _ModuleBase available the chain
    # reduces to the identity fast path above.


if __name__ == "__main__":
    key = jax.random.PRNGKey(0)

    batch = 2
    in_shape = (4, 16, 16)          # (C, H, W)
    num_modules = 3                 # three identity (_ModuleBase) stages

    mod = SequentialModulePallas(in_shape, num_modules)

    x = jax.random.normal(key, (batch,) + in_shape, dtype=jnp.float32)
    x_host = jax.device_get(x)      # reference copy
    h0 = mod.get_initial_state(batch)

    # 1) Module forward: identity chain -> zero-cost fast path.
    y, new_state = mod.forward(x, h0)
    y = jax.block_until_ready(y)
    assert y.shape == x_host.shape
    assert jnp.allclose(y, x_host), "sequential identity chain mismatch"
    assert len(new_state) == num_modules
    assert all(s == () for s in new_state)

    # 2) Exercise the Pallas fusion scaffold on TPU (what forward() would run
    #    with non-identity children).  Use a dedicated, donated device buffer
    #    so input/output aliasing is actually realized; do not reuse it after.
    x_scaffold = jnp.array(x_host)
    y2 = jax.block_until_ready(fused_chain_pallas(x_scaffold))
    assert y2.shape == x_host.shape
    assert jnp.allclose(jax.device_get(y2), x_host), "pallas scaffold mismatch"

    # 3) get_initial_output: zeros of the last child's out_shape, matching dtype.
    init_out = jax.block_until_ready(
        mod.get_initial_output(batch, dtype=x_host.dtype))
    assert init_out.shape == (batch,) + in_shape
    assert init_out.dtype == x_host.dtype
    assert jnp.allclose(init_out, 0.0)

    print("KERNEL_OK")
</pallas_src>

<mosaic_0001>
module attributes {stable_mosaic.version = 11 : i64} {
  func.func @_seq_passthrough_kernel(%arg0: i32, %arg1: memref<8x128xf32, #tpu.memory_space<vmem>>, %arg2: memref<8x128xf32, #tpu.memory_space<vmem>>) attributes {dimension_semantics = [#tpu.dimension_semantics<parallel>], iteration_bounds = array<i64: 2>, scalar_prefetch = 0 : i64, scratch_operands = 0 : i64, tpu.core_type = #tpu.core_type<tc>, window_params = [{transform_indices = @transform_0, window_bounds = array<i64: 8, 128>}, {transform_indices = @transform_1, window_bounds = array<i64: 8, 128>}]} {
    %c0 = arith.constant 0 : index
    %c0_0 = arith.constant 0 : index
    %0 = vector.load %arg1[%c0, %c0_0] : memref<8x128xf32, #tpu.memory_space<vmem>>, vector<8x128xf32>
    %c0_1 = arith.constant 0 : index
    %c0_2 = arith.constant 0 : index
    %1 = vector.load %arg2[%c0_1, %c0_2] : memref<8x128xf32, #tpu.memory_space<vmem>>, vector<8x128xf32>
    tpu.vector_store %arg2[%c0_1, %c0_2], %0 {strides = array<i32>} : memref<8x128xf32, #tpu.memory_space<vmem>>, vector<8x128xf32>,
    return
  }
  func.func @transform_0(%arg0: i32) -> (i32, i32) {
    %c0_i32 = arith.constant 0 : i32
    %c0_i32_0 = arith.constant 0 : i32
    return %arg0, %c0_i32 : i32, i32
  }
  func.func @transform_1(%arg0: i32) -> (i32, i32) {
    %c0_i32 = arith.constant 0 : i32
    %c0_i32_0 = arith.constant 0 : i32
    return %arg0, %c0_i32 : i32, i32
  }
}

</mosaic_0001>

<llo_original>
// kernel: _pallas_copy.1
$region0: #{_pallas_copy.1}
  #allocation0 [shape = 'u32[]', space=smem, size = 0x4, offset = 0x4, fixed_abs, tag = 'smem constant byte address 0x4 - core index']
  #allocation1 [shape = 'u32[144,128]{1,0:T(1,128)}', space=vmem, size = 0x12000, scoped, tag = 'internal scratch']
  %s0 = inlined_call_operand.vmem [shape: f32[16,128], index: 0, kind: input, shape index: {}, may-alias: {0,1}]
  %s1 = inlined_call_operand.vmem [shape: f32[16,128], index: 1, kind: output, shape index: {}, may-alias: {0,1}]
  %s2 = sld [smem:[#allocation0]]
  $region37: #{_pallas_copy.1} parent=0
    _
  %s4 = ssub.s32 1, %s2
  %s5 = scalar_select 0, %s4, %s2
  loop: start=0, step=1, limit=4
  $region2: #{_pallas_copy.1} parent=0 // loop_pre_header
    _
  $region3: #{_pallas_copy.1} parent=0 // loop_header
    %s7 = sphi 0, %s11
    %p8 = scmp.ge.s32.totalorder %s7, 4
    %s17 = sphi 0, %s19
    %s20 = sphi 0, %s17
    %s21 = sphi 0, %s20
    %s37 = sphi 0, %s21
    %s43 = sphi 0, %s45
    %s46 = sphi 0, %s43
    %s47 = sphi 0, %s46
    %s63 = sphi 0, %s47
  $region4: #{_pallas_copy.1} parent=0 // loop_header_branch
    %10 = sbr.rel (%p8) target = $region8
  $region5: #{_pallas_copy.1} parent=0 // loop_body
    %s12 = ssub.s32 %s7, 1
    %s13 = ssub.s32 %s7, 2
    %s14 = sadd.s32 %s7, 1
    %s15 = ssub.s32 %s7, %s14
    %p16 = scmp.eq.s32.totalorder %s15, 0
    %s18 = sadd.s32 %s17, 1
    %s19 = scalar_select %p16, %s17, %s18
    %p22 = pneg %p16
    %p23 = scmp.eq.s32.totalorder %s7, 1
    %p24 = por %p22, %p23
    %p25 = scmp.ne.s32.totalorder %s17, %s20
    %p26 = scmp.eq.s32.totalorder %s7, 0
    %p27 = por %p25, %p26
    %p28 = scmp.ne.s32.totalorder %s17, %s20
    %p29 = scmp.eq.s32.totalorder %s12, 1
    %p30 = por %p28, %p29
    %p31 = scmp.ne.s32.totalorder %s20, %s21
    %p32 = scmp.eq.s32.totalorder %s12, 0
    %p33 = por %p31, %p32
    %p34 = scmp.ne.s32.totalorder %s20, %s21
    %p35 = scmp.eq.s32.totalorder %s13, 1
    %p36 = por %p34, %p35
    %p38 = scmp.ne.s32.totalorder %s21, %s37
    %p39 = scmp.eq.s32.totalorder %s13, 0
    %p40 = por %p38, %p39
    %s41 = ssub.s32 %s7, %s14
    %p42 = scmp.eq.s32.totalorder %s41, 0
    %s44 = sadd.s32 %s43, 1
    %s45 = scalar_select %p42, %s43, %s44
    %p48 = pneg %p42
    %p49 = scmp.eq.s32.totalorder %s7, 1
    %p50 = por %p48, %p49
    %p51 = scmp.ne.s32.totalorder %s43, %s46
    %p52 = scmp.eq.s32.totalorder %s7, 0
    %p53 = por %p51, %p52
    %p54 = scmp.ne.s32.totalorder %s43, %s46
    %p55 = scmp.eq.s32.totalorder %s12, 1
    %p56 = por %p54, %p55
    %p57 = scmp.ne.s32.totalorder %s46, %s47
    %p58 = scmp.eq.s32.totalorder %s12, 0
    %p59 = por %p57, %p58
    %p60 = scmp.ne.s32.totalorder %s46, %s47
    %p61 = scmp.eq.s32.totalorder %s13, 1
    %p62 = por %p60, %p61
    %p64 = scmp.ne.s32.totalorder %s47, %s63
    %p65 = scmp.eq.s32.totalorder %s13, 0
    %p66 = por %p64, %p65
    %p67 = scmp.le.s32.totalorder 1, %s7
    %p68 = scmp.lt.s32.totalorder %s7, 3
    %p69 = pnand %p67, %p68
    %p70 = pneg %p69
    // Predicated region
    $region9: #{_pallas_copy.1} parent=5 // pred_check
      _
    $region10: #{_pallas_copy.1} parent=5 // pred_check_branch
      %72 = sbr.rel (%p69) target = $region12
    $region11: #{_pallas_copy.1} parent=5 // pred_region
      %s73 = ssub.s32 %s7, 1
    $region12: #{_pallas_copy.1} parent=5 // pred_fallthru
      _
    %p74 = scmp.lt.s32.totalorder %s7, 2
    // Predicated region
    $region13: #{_pallas_copy.1} parent=5 // pred_check
      %p75 = pneg %p74
    $region14: #{_pallas_copy.1} parent=5 // pred_check_branch
      %77 = sbr.rel (%p75) target = $region16
    $region15: #{_pallas_copy.1} parent=5 // pred_region
      // Predicated region
      $region17: #{_pallas_copy.1} parent=15 // pred_check
        %p78 = pneg %p27
      $region18: #{_pallas_copy.1} parent=15 // pred_check_branch
        %80 = sbr.rel (%p78) target = $region20
      $region19: #{_pallas_copy.1} parent=15 // pred_region
        %p81 = scmp.lt.s32.totalorder %s7, 1
        %s82 = scalar_select %p81, %s7, 1
        %s83 = smul.addr %s82, 8
        %s84 = scalar_lea.vmem %s0, %s83
      $region20: #{_pallas_copy.1} parent=15 // pred_fallthru
        _
    $region16: #{_pallas_copy.1} parent=5 // pred_fallthru
      _
    %p85 = scmp.le.s32.totalorder 1, %s7
    %p86 = scmp.lt.s32.totalorder %s7, 3
    %p87 = pnand %p85, %p86
    %p88 = pneg %p87
    // Predicated region
    $region21: #{_pallas_copy.1} parent=5 // pred_check
      _
    $region22: #{_pallas_copy.1} parent=5 // pred_check_branch
      %90 = sbr.rel (%p87) target = $region24
    $region23: #{_pallas_copy.1} parent=5 // pred_region
      %s91 = ssub.s32 %s7, 1
      %p92 = scmp.lt.s32.totalorder %s12, 1
      %s93 = scalar_select %p92, %s12, 1
      %s94 = smul.addr %s93, 8
      %s95 = scalar_lea.vmem %s0, %s94
      %p96 = pneg %p33
      %p97 = pneg %p30
      %p98 = pneg %p59
      %p99 = pneg %p56
      %p100 = scmp.lt.s32.totalorder %s12, 1
      %s101 = scalar_select %p100, %s12, 1
      %s102 = smul.addr %s101, 8
      %s103 = scalar_lea.vmem %s1, %s102
      %p104 = scmp.lt.s32.totalorder %s12, 1
      %s105 = scalar_select %p104, %s12, 1
      %s106 = smul.addr %s105, 8
      %s107 = scalar_lea.vmem %s0, %s106
      %p108 = scmp.lt.s32.totalorder %s12, 1
      %s109 = scalar_select %p108, %s12, 1
      %s110 = smul.addr %s109, 8
      %s111 = scalar_lea.vmem %s1, %s110
      %v112 = vld [vmem:[%s107] sm:$0xff]
      %113 = vst [vmem:[%s111] sm:$0xff] %v112
      %p114 = scmp.lt.s32.totalorder %s12, 1
      %s115 = scalar_select %p114, %s12, 1
      %s116 = smul.addr %s115, 8
      %s117 = scalar_lea.vmem %s1, %s116
      // Predicated region
      $region25: #{_pallas_copy.1} parent=23 // pred_check
        %p118 = pneg %p56
      $region26: #{_pallas_copy.1} parent=23 // pred_check_branch
        %120 = sbr.rel (%p118) target = $region28
      $region27: #{_pallas_copy.1} parent=23 // pred_region
        _
      $region28: #{_pallas_copy.1} parent=23 // pred_fallthru
        _
    $region24: #{_pallas_copy.1} parent=5 // pred_fallthru
      _
    %p121 = scmp.le.s32.totalorder 2, %s7
    // Predicated region
    $region29: #{_pallas_copy.1} parent=5 // pred_check
      %p122 = pneg %p121
    $region30: #{_pallas_copy.1} parent=5 // pred_check_branch
      %124 = sbr.rel (%p122) target = $region32
    $region31: #{_pallas_copy.1} parent=5 // pred_region
      %s125 = ssub.s32 %s7, 2
      // Predicated region
      $region33: #{_pallas_copy.1} parent=31 // pred_check
        %p126 = pneg %p62
      $region34: #{_pallas_copy.1} parent=31 // pred_check_branch
        %128 = sbr.rel (%p126) target = $region36
      $region35: #{_pallas_copy.1} parent=31 // pred_region
        %p129 = scmp.lt.s32.totalorder %s13, 1
        %s130 = scalar_select %p129, %s13, 1
        %s131 = smul.addr %s130, 8
        %s132 = scalar_lea.vmem %s1, %s131
      $region36: #{_pallas_copy.1} parent=31 // pred_fallthru
        _
    $region32: #{_pallas_copy.1} parent=5 // pred_fallthru
      _
  $region6: #{_pallas_copy.1} parent=0 // loop_footer
    %s11 = sadd.s32 1, %s7
  $region7: #{_pallas_copy.1} parent=0 // loop_footer_branch
    %6 = sbr.rel target = $region3
  $region8: #{_pallas_copy.1} parent=0 // loop_exit
    _

</llo_original>
